<compile_context>
chip_gen: v7x
topology: tpu7x:2x2x1
jax: 0.10.0
libtpu: 0.0.40
codegen_flags: <defaults>
</compile_context>

<pallas_src>
import jax
import jax.numpy as jnp
from jax.experimental import pallas as pl
from jax.experimental.pallas import tpu as pltpu

_VMEM_LIMIT_BYTES = 48 * 1024 * 1024  # >= default scoped limit everywhere, < v7x physical


def _pick_tile(n, candidates):
    """Largest candidate that evenly tiles n, else fall back to the full extent."""
    for c in candidates:
        if c <= n and n % c == 0:
            return c
    return n


def _posneg_kernel(ids_col_ref, ids_row_ref, sq_col_ref, sq_row_ref,
                   emb_tile_ref, embT_ref, pos_ref, neg_ref):
    tm = emb_tile_ref.shape[0]
    n = embT_ref.shape[1]
    row0 = pl.program_id(0) * tm

    # dot[i, j] = <emb[row0+i], emb[j]>  — canonical (M,K)x(K,N) MXU matmul,
    # f32 accumulation.
    dot = jnp.dot(emb_tile_ref[...], embT_ref[...],
                  preferred_element_type=jnp.float32)                # (TM, N)

    # pairwise squared distances; negatives clamped to 0 (matches the torch
    # masked assignment `pairwise_dist[pdn] = 0.0`).
    pairwise = jnp.maximum(sq_row_ref[...] - 2.0 * dot + sq_col_ref[...], 0.0)

    same = ids_col_ref[...] == ids_row_ref[...]                      # (TM, N) bool
    rows = jax.lax.broadcasted_iota(jnp.int32, (tm, n), 0) + row0
    cols = jax.lax.broadcasted_iota(jnp.int32, (tm, n), 1)
    not_diag = rows != cols

    # hardest positive: max over same-id, off-diagonal entries
    # (pairwise >= 0, so where(mask, pairwise, 0) == mask.float() * pairwise)
    pos_ref[...] = jnp.max(
        jnp.where(jnp.logical_and(same, not_diag), pairwise, 0.0),
        axis=1, keepdims=True)                                       # (TM, 1)

    # hardest negative: min over (pairwise + max_row on same-id entries),
    # i.e. the exact `pairwise + max_row * (1 - mask_neg)` sentinel of the ref.
    max_row = jnp.max(pairwise, axis=1, keepdims=True)               # (TM, 1)
    neg_ref[...] = jnp.min(
        jnp.where(same, pairwise + max_row, pairwise),
        axis=1, keepdims=True)                                       # (TM, 1)


def _make_loss_kernel(margin):
    def loss_kernel(pos_ref, neg_ref, loss_ref):
        # loss[i, j] = relu(pos[i] - neg[j] + margin)  — (TM,1) - (1,TN) broadcast
        loss_ref[...] = jnp.maximum(pos_ref[...] - neg_ref[...] + margin, 0.0)
    return loss_kernel


def hard_negative_triplet_miner(ids, embeddings, margin: float = 0.5):
    """JAX/Pallas equivalent of HardNegativeTripletMiner.forward.

    ids:        (N,)   integer labels
    embeddings: (N, D) float embeddings
    returns (loss, None) with loss of shape (N, N) — same broadcast semantics
    as the reference PyTorch module.
    """
    n, d = embeddings.shape
    emb = embeddings.astype(jnp.float32)
    emb_t = emb.T                          # (D, N), one-time XLA transpose
    ids_i = ids.astype(jnp.int32)
    ids_col = ids_i.reshape(n, 1)
    ids_row = ids_i.reshape(1, n)

    # Squared norms computed directly from embeddings (== diag(emb @ emb.T)),
    # prepared once in both layouts so the kernel never relayouts (N,1)<->(1,N).
    sq = jnp.sum(emb * emb, axis=-1)
    sq_col = sq.reshape(n, 1)
    sq_row = sq.reshape(1, n)

    # ---- pass 1: per-anchor hardest positive / hardest negative ----
    tm1 = _pick_tile(n, (256, 128, 64, 32, 16, 8))
    pos, neg = pl.pallas_call(
        _posneg_kernel,
        out_shape=(jax.ShapeDtypeStruct((n, 1), jnp.float32),
                   jax.ShapeDtypeStruct((n, 1), jnp.float32)),
        grid_spec=pltpu.PrefetchScalarGridSpec(
            num_scalar_prefetch=0,
            grid=(n // tm1,),
            in_specs=[
                pl.BlockSpec((tm1, 1), lambda i: (i, 0)),   # ids, column layout
                pl.BlockSpec((1, n), lambda i: (0, 0)),     # ids, row layout
                pl.BlockSpec((tm1, 1), lambda i: (i, 0)),   # sq norms, column
                pl.BlockSpec((1, n), lambda i: (0, 0)),     # sq norms, row
                pl.BlockSpec((tm1, d), lambda i: (i, 0)),   # emb row tile (M, K)
                pl.BlockSpec((d, n), lambda i: (0, 0)),     # emb^T, all cols (K, N)
            ],
            out_specs=[
                pl.BlockSpec((tm1, 1), lambda i: (i, 0)),
                pl.BlockSpec((tm1, 1), lambda i: (i, 0)),
            ],
        ),
        compiler_params=pltpu.CompilerParams(
            dimension_semantics=("parallel",),
            vmem_limit_bytes=_VMEM_LIMIT_BYTES),
    )(ids_col, ids_row, sq_col, sq_row, emb, emb_t)

    # (N,1) -> (1,N) relayout done once outside the kernels (cheap XLA op).
    neg_row = neg.reshape(1, n)

    # ---- pass 2: lane-dense elementwise broadcast loss ----
    tm2 = _pick_tile(n, (512, 256, 128, 64, 32, 16, 8))
    tn2 = _pick_tile(n, (2048, 1024, 512, 256, 128))
    loss = pl.pallas_call(
        _make_loss_kernel(float(margin)),
        out_shape=jax.ShapeDtypeStruct((n, n), jnp.float32),
        grid_spec=pltpu.PrefetchScalarGridSpec(
            num_scalar_prefetch=0,
            grid=(n // tm2, n // tn2),
            in_specs=[
                pl.BlockSpec((tm2, 1), lambda i, j: (i, 0)),
                pl.BlockSpec((1, tn2), lambda i, j: (0, j)),
            ],
            out_specs=pl.BlockSpec((tm2, tn2), lambda i, j: (i, j)),
        ),
        compiler_params=pltpu.CompilerParams(
            dimension_semantics=("parallel", "parallel"),
            vmem_limit_bytes=_VMEM_LIMIT_BYTES),
    )(pos, neg_row)

    return loss, None


def _reference(ids, embeddings, margin=0.5):
    """Pure-JAX reference mirroring the PyTorch module.

    square_norm is computed as sum(emb*emb) which is mathematically identical
    to torch.diag(emb @ emb.T) used in the reference.
    """
    emb = embeddings.astype(jnp.float32)
    dot = emb @ emb.T
    sq = jnp.sum(emb * emb, axis=-1)
    pd = jnp.maximum(sq[None, :] - 2.0 * dot + sq[:, None], 0.0)
    n = ids.shape[0]
    eye = jnp.eye(n, dtype=bool)
    same = ids[None, :] == ids[:, None]
    mask_pos = (~eye) & same
    pos = jnp.max(mask_pos.astype(jnp.float32) * pd, axis=1, keepdims=True)   # (N,1)
    mask_neg = ids[None, :] != ids[:, None]
    mx = jnp.max(pd, axis=1, keepdims=True)
    neg = jnp.min(pd + mx * (1.0 - mask_neg.astype(jnp.float32)), axis=1)     # (N,)
    return jnp.maximum(pos - neg[None, :] + margin, 0.0)                      # (N,N)


if __name__ == "__main__":
    key = jax.random.PRNGKey(0)
    k_ids, k_emb = jax.random.split(key)

    N, D = 8, 32
    ids = jax.random.randint(k_ids, (N,), 0, 3, dtype=jnp.int32)   # ensures positives exist
    embeddings = jax.random.normal(k_emb, (N, D), dtype=jnp.float32)

    loss, _ = hard_negative_triplet_miner(ids, embeddings, margin=0.5)
    loss = jax.block_until_ready(loss)

    ref = _reference(ids, embeddings, margin=0.5)
    assert loss.shape == (N, N), loss.shape
    assert jnp.allclose(loss, ref, atol=1e-4, rtol=1e-4), (
        "mismatch vs reference:\n%s\n%s" % (loss, ref)
    )
    print("KERNEL_OK")
</pallas_src>

<mosaic_0001>
module attributes {stable_mosaic.version = 11 : i64} {
  func.func @_posneg_kernel(%arg0: i32, %arg1: memref<8x1xi32, #tpu.memory_space<vmem>>, %arg2: memref<1x8xi32, #tpu.memory_space<vmem>>, %arg3: memref<8x1xf32, #tpu.memory_space<vmem>>, %arg4: memref<1x8xf32, #tpu.memory_space<vmem>>, %arg5: memref<8x32xf32, #tpu.memory_space<vmem>>, %arg6: memref<32x8xf32, #tpu.memory_space<vmem>>, %arg7: memref<8x1xf32, #tpu.memory_space<vmem>>, %arg8: memref<8x1xf32, #tpu.memory_space<vmem>>) attributes {dimension_semantics = [#tpu.dimension_semantics<parallel>], iteration_bounds = array<i64: 1>, scalar_prefetch = 0 : i64, scratch_operands = 0 : i64, tpu.core_type = #tpu.core_type<tc>, window_params = [{transform_indices = @transform_0, window_bounds = array<i64: 8, 1>}, {pipeline_mode = #tpu.pipeline_mode<synchronous>, transform_indices = @transform_1, window_bounds = array<i64: 1, 8>}, {transform_indices = @transform_2, window_bounds = array<i64: 8, 1>}, {pipeline_mode = #tpu.pipeline_mode<synchronous>, transform_indices = @transform_3, window_bounds = array<i64: 1, 8>}, {transform_indices = @transform_4, window_bounds = array<i64: 8, 32>}, {pipeline_mode = #tpu.pipeline_mode<synchronous>, transform_indices = @transform_5, window_bounds = array<i64: 32, 8>}, {transform_indices = @transform_6, window_bounds = array<i64: 8, 1>}, {transform_indices = @transform_7, window_bounds = array<i64: 8, 1>}]} {
    %c8_i32 = arith.constant 8 : i32
    %0 = arith.muli %arg0, %c8_i32 : i32
    %c0 = arith.constant 0 : index
    %c0_0 = arith.constant 0 : index
    %1 = vector.load %arg5[%c0, %c0_0] : memref<8x32xf32, #tpu.memory_space<vmem>>, vector<8x32xf32>
    %c0_1 = arith.constant 0 : index
    %c0_2 = arith.constant 0 : index
    %2 = vector.load %arg6[%c0_1, %c0_2] : memref<32x8xf32, #tpu.memory_space<vmem>>, vector<32x8xf32>
    %cst = arith.constant dense<0.000000e+00> : vector<8x8xf32>
    %3 = tpu.matmul %1, %2, %cst {dimension_numbers = #tpu.dot_dimension_numbers<[1], [0], [0], [1], [0, 0, 1, 1], [], []>} : vector<8x32xf32>, vector<32x8xf32>, vector<8x8xf32> -> vector<8x8xf32>
    %c0_3 = arith.constant 0 : index
    %c0_4 = arith.constant 0 : index
    %4 = vector.load %arg4[%c0_3, %c0_4] : memref<1x8xf32, #tpu.memory_space<vmem>>, vector<1x8xf32>
    %cst_5 = arith.constant 2.000000e+00 : f32
    %5 = vector.broadcast %cst_5 : f32 to vector<8x8xf32>
    %6 = arith.mulf %5, %3 : vector<8x8xf32>
    %7 = vector.broadcast %4 : vector<1x8xf32> to vector<8x8xf32>
    %8 = arith.subf %7, %6 : vector<8x8xf32>
    %c0_6 = arith.constant 0 : index
    %c0_7 = arith.constant 0 : index
    %9 = vector.load %arg3[%c0_6, %c0_7] : memref<8x1xf32, #tpu.memory_space<vmem>>, vector<8x1xf32>
    %10 = vector.broadcast %9 : vector<8x1xf32> to vector<8x8xf32>
    %11 = arith.addf %8, %10 : vector<8x8xf32>
    %cst_8 = arith.constant 0.000000e+00 : f32
    %12 = vector.broadcast %cst_8 : f32 to vector<8x8xf32>
    %13 = arith.maximumf %11, %12 : vector<8x8xf32>
    %c0_9 = arith.constant 0 : index
    %c0_10 = arith.constant 0 : index
    %14 = vector.load %arg1[%c0_9, %c0_10] : memref<8x1xi32, #tpu.memory_space<vmem>>, vector<8x1xi32>
    %c0_11 = arith.constant 0 : index
    %c0_12 = arith.constant 0 : index
    %15 = vector.load %arg2[%c0_11, %c0_12] : memref<1x8xi32, #tpu.memory_space<vmem>>, vector<1x8xi32>
    %16 = vector.broadcast %14 : vector<8x1xi32> to vector<8x8xi32>
    %17 = vector.broadcast %15 : vector<1x8xi32> to vector<8x8xi32>
    %18 = arith.cmpi eq, %16, %17 : vector<8x8xi32>
    %19 = tpu.iota {dimensions = array<i32: 0>} : vector<8x8xi32>
    %20 = vector.broadcast %0 : i32 to vector<8x8xi32>
    %21 = arith.addi %19, %20 : vector<8x8xi32>
    %22 = tpu.iota {dimensions = array<i32: 1>} : vector<8x8xi32>
    %23 = arith.cmpi ne, %21, %22 : vector<8x8xi32>
    %24 = arith.andi %18, %23 : vector<8x8xi1>
    %cst_13 = arith.constant 0.000000e+00 : f32
    %25 = vector.broadcast %cst_13 : f32 to vector<8x8xf32>
    %26 = arith.select %24, %13, %25 : vector<8x8xi1>, vector<8x8xf32>
    %cst_14 = arith.constant dense<0xFF800000> : vector<8xf32>
    %27 = vector.multi_reduction <maximumf>, %26, %cst_14 [1] : vector<8x8xf32> to vector<8xf32>
    %28 = vector.shape_cast %27 : vector<8xf32> to vector<8x1xf32>
    %c0_15 = arith.constant 0 : index
    %c0_16 = arith.constant 0 : index
    %29 = vector.load %arg7[%c0_15, %c0_16] : memref<8x1xf32, #tpu.memory_space<vmem>>, vector<8x1xf32>
    tpu.vector_store %arg7[%c0_15, %c0_16], %28 {strides = array<i32>} : memref<8x1xf32, #tpu.memory_space<vmem>>, vector<8x1xf32>,
    %cst_17 = arith.constant dense<0xFF800000> : vector<8xf32>
    %30 = vector.multi_reduction <maximumf>, %13, %cst_17 [1] : vector<8x8xf32> to vector<8xf32>
    %31 = vector.shape_cast %30 : vector<8xf32> to vector<8x1xf32>
    %32 = vector.broadcast %31 : vector<8x1xf32> to vector<8x8xf32>
    %33 = arith.addf %13, %32 : vector<8x8xf32>
    %34 = arith.select %18, %33, %13 : vector<8x8xi1>, vector<8x8xf32>
    %cst_18 = arith.constant dense<0x7F800000> : vector<8xf32>
    %35 = vector.multi_reduction <minimumf>, %34, %cst_18 [1] : vector<8x8xf32> to vector<8xf32>
    %36 = vector.shape_cast %35 : vector<8xf32> to vector<8x1xf32>
    %c0_19 = arith.constant 0 : index
    %c0_20 = arith.constant 0 : index
    %37 = vector.load %arg8[%c0_19, %c0_20] : memref<8x1xf32, #tpu.memory_space<vmem>>, vector<8x1xf32>
    tpu.vector_store %arg8[%c0_19, %c0_20], %36 {strides = array<i32>} : memref<8x1xf32, #tpu.memory_space<vmem>>, vector<8x1xf32>,
    return
  }
  func.func @transform_0(%arg0: i32) -> (i32, i32) {
    %c0_i32 = arith.constant 0 : i32
    %c0_i32_0 = arith.constant 0 : i32
    return %arg0, %c0_i32 : i32, i32
  }
  func.func @transform_1(%arg0: i32) -> (i32, i32) {
    %c0_i32 = arith.constant 0 : i32
    %c0_i32_0 = arith.constant 0 : i32
    %c0_i32_1 = arith.constant 0 : i32
    return %c0_i32, %c0_i32_0 : i32, i32
  }
  func.func @transform_2(%arg0: i32) -> (i32, i32) {
    %c0_i32 = arith.constant 0 : i32
    %c0_i32_0 = arith.constant 0 : i32
    return %arg0, %c0_i32 : i32, i32
  }
  func.func @transform_3(%arg0: i32) -> (i32, i32) {
    %c0_i32 = arith.constant 0 : i32
    %c0_i32_0 = arith.constant 0 : i32
    %c0_i32_1 = arith.constant 0 : i32
    return %c0_i32, %c0_i32_0 : i32, i32
  }
  func.func @transform_4(%arg0: i32) -> (i32, i32) {
    %c0_i32 = arith.constant 0 : i32
    %c0_i32_0 = arith.constant 0 : i32
    return %arg0, %c0_i32 : i32, i32
  }
  func.func @transform_5(%arg0: i32) -> (i32, i32) {
    %c0_i32 = arith.constant 0 : i32
    %c0_i32_0 = arith.constant 0 : i32
    %c0_i32_1 = arith.constant 0 : i32
    return %c0_i32, %c0_i32_0 : i32, i32
  }
  func.func @transform_6(%arg0: i32) -> (i32, i32) {
    %c0_i32 = arith.constant 0 : i32
    %c0_i32_0 = arith.constant 0 : i32
    return %arg0, %c0_i32 : i32, i32
  }
  func.func @transform_7(%arg0: i32) -> (i32, i32) {
    %c0_i32 = arith.constant 0 : i32
    %c0_i32_0 = arith.constant 0 : i32
    return %arg0, %c0_i32 : i32, i32
  }
}

</mosaic_0001>

<llo_original>
// kernel: tpu_custom_call.1
$region0: #{tpu_custom_call.1}
  #allocation0 [shape = 'u32[]', space=smem, size = 0x4, offset = 0x4, fixed_abs, tag = 'smem constant byte address 0x4 - core index']
  #allocation1 [shape = 'u32[144,128]{1,0:T(1,128)}', space=vmem, size = 0x12000, scoped, tag = 'internal scratch']
  %s0 = inlined_call_operand.vmem [shape: s32[8,1], index: 0, kind: input, shape index: {}]
  %s1 = inlined_call_operand.vmem [shape: s32[1,8], index: 1, kind: input, shape index: {}]
  %s2 = inlined_call_operand.vmem [shape: f32[8,1], index: 2, kind: input, shape index: {}]
  %s3 = inlined_call_operand.vmem [shape: f32[1,8], index: 3, kind: input, shape index: {}]
  %s4 = inlined_call_operand.vmem [shape: f32[8,32], index: 4, kind: input, shape index: {}]
  %s5 = inlined_call_operand.vmem [shape: f32[32,8], index: 5, kind: input, shape index: {}]
  %s6 = inlined_call_operand.vmem [shape: f32[8,1], index: 6, kind: output, shape index: {0}]
  %s7 = inlined_call_operand.vmem [shape: f32[8,1], index: 7, kind: output, shape index: {1}]
  %8 = xla_tuple %s6, %s7
  %s9 = sld [smem:[#allocation0]]
  $region42: #{tpu_custom_call.1} parent=0
    _
  %s11 = ssub.s32 1, %s9
  %s12 = scalar_select 0, %s11, %s9
  // Predicated region
  $region2: #{tpu_custom_call.1} parent=0 // pred_check
    _
  $region3: #{tpu_custom_call.1} parent=0 // pred_check_branch
    %14 = sbr.rel (0) target = $region5
  $region4: #{tpu_custom_call.1} parent=0 // pred_region
    _
  $region5: #{tpu_custom_call.1} parent=0 // pred_fallthru
    _
  // Predicated region
  $region6: #{tpu_custom_call.1} parent=0 // pred_check
    _
  $region7: #{tpu_custom_call.1} parent=0 // pred_check_branch
    %16 = sbr.rel (0) target = $region9
  $region8: #{tpu_custom_call.1} parent=0 // pred_region
    _
  $region9: #{tpu_custom_call.1} parent=0 // pred_fallthru
    _
  // Predicated region
  $region10: #{tpu_custom_call.1} parent=0 // pred_check
    _
  $region11: #{tpu_custom_call.1} parent=0 // pred_check_branch
    %18 = sbr.rel (0) target = $region13
  $region12: #{tpu_custom_call.1} parent=0 // pred_region
    _
  $region13: #{tpu_custom_call.1} parent=0 // pred_fallthru
    _
  // Predicated region
  $region14: #{tpu_custom_call.1} parent=0 // pred_check
    _
  $region15: #{tpu_custom_call.1} parent=0 // pred_check_branch
    %20 = sbr.rel (0) target = $region17
  $region16: #{tpu_custom_call.1} parent=0 // pred_region
    _
  $region17: #{tpu_custom_call.1} parent=0 // pred_fallthru
    _
  // Predicated region
  $region18: #{tpu_custom_call.1} parent=0 // pred_check
    _
  $region19: #{tpu_custom_call.1} parent=0 // pred_check_branch
    %22 = sbr.rel (0) target = $region21
  $region20: #{tpu_custom_call.1} parent=0 // pred_region
    _
  $region21: #{tpu_custom_call.1} parent=0 // pred_fallthru
    _
  // Predicated region
  $region22: #{tpu_custom_call.1} parent=0 // pred_check
    _
  $region23: #{tpu_custom_call.1} parent=0 // pred_check_branch
    %24 = sbr.rel (0) target = $region25
  $region24: #{tpu_custom_call.1} parent=0 // pred_region
    _
  $region25: #{tpu_custom_call.1} parent=0 // pred_fallthru
    _
  %s25 = smul.u32 0, 8
  %v26 = vld [vmem:[%s4] sm:$0xff]
  %v27 = vld [vmem:[%s5] sm:$0xff]
  %v28 = vld [vmem:[%s5 + $0x8] sm:$0xff]
  %v29 = vld [vmem:[%s5 + $0x10] sm:$0xff]
  %v30 = vld [vmem:[%s5 + $0x18] sm:$0xff]
  %vm31 = vcmask 261120
  %v33 = vsel %vm31, %v26, 0
  %35 = vmatprep.subr.mxu0 0.0
  %36 = vmatpush1.msra.mxu0 %v27
  %37 = vmatprep.subr.mxu0 0.0
  %38 = vmatpush1.msra.mxu0 %v28
  %39 = vmatprep.subr.mxu0 0.0
  %40 = vmatpush1.msra.mxu0 %v29
  %41 = vmatprep.subr.mxu0 0.0
  %42 = vmatpush1.msra.mxu0 %v30
  %43 = vmatprep.subr.mxu0 0.0
  %44 = vmatpush1.msra.mxu0 0.0
  %45 = vmatprep.subr.mxu0 0.0
  %46 = vmatpush1.msra.mxu0 0.0
  %47 = vmatprep.subr.mxu0 0.0
  %48 = vmatpush1.msra.mxu0 0.0
  %49 = vmatprep.subr.mxu0 0.0
  %50 = vmatpush1.msra.mxu0 0.0
  %51 = vmatprep.subr.mxu0 0.0
  %52 = vmatpush1.msra.mxu0 0.0
  %53 = vmatprep.subr.mxu0 0.0
  %54 = vmatpush1.msra.mxu0 0.0
  %55 = vmatprep.subr.mxu0 0.0
  %56 = vmatpush1.msra.mxu0 0.0
  %57 = vmatprep.subr.mxu0 0.0
  %58 = vmatpush1.msra.mxu0 0.0
  %59 = vmatprep.subr.mxu0 0.0
  %60 = vmatpush1.msra.mxu0 0.0
  %61 = vmatprep.subr.mxu0 0.0
  %62 = vmatpush1.msra.mxu0 0.0
  %63 = vmatprep.subr.mxu0 0.0
  %64 = vmatpush1.msra.mxu0 0.0
  %65 = vmatprep.subr.mxu0 0.0
  %66 = vmatpush1.msra.mxu0 0.0
  %67 = vmatprep.subr.mxu0 0.0
  %68 = vmatpush1.msra.mxu0 0.0
  %69 = vmatprep.subr.mxu0 0.0
  %70 = vmatpush1.msra.mxu0 0.0
  %71 = vmatprep.subr.mxu0 0.0
  %72 = vmatpush1.msra.mxu0 0.0
  %73 = vmatprep.subr.mxu0 0.0
  %74 = vmatpush1.msra.mxu0 0.0
  %75 = vmatprep.subr.mxu0 0.0
  %76 = vmatpush1.msra.mxu0 0.0
  %77 = vmatprep.subr.mxu0 0.0
  %78 = vmatpush1.msra.mxu0 0.0
  %79 = vmatprep.subr.mxu0 0.0
  %80 = vmatpush1.msra.mxu0 0.0
  %81 = vmatprep.subr.mxu0 0.0
  %82 = vmatpush1.msra.mxu0 0.0
  %83 = vmatprep.subr.mxu0 0.0
  %84 = vmatpush1.msra.mxu0 0.0
  %85 = vmatprep.subr.mxu0 0.0
  %86 = vmatpush1.msra.mxu0 0.0
  %87 = vmatprep.subr.mxu0 0.0
  %88 = vmatpush1.msra.mxu0 0.0
  %89 = vmatprep.subr.mxu0 0.0
  %90 = vmatpush1.msra.mxu0 0.0
  %91 = vmatprep.subr.mxu0 0.0
  %92 = vmatpush1.msra.mxu0 0.0
  %93 = vmatprep.subr.mxu0 0.0
  %94 = vmatpush1.msra.mxu0 0.0
  %95 = vmatprep.subr.mxu0 0.0
  %96 = vmatpush1.msra.mxu0 0.0
  %97 = vmatprep.subr.mxu0 0.0
  %98 = vmatpush1.msra.mxu0 0.0
  %99 = vmatprep.mubr.f32.mxu0 0.0
  %100 = vmatmul.mubr.f32.gmra.mrb[0].mxu0 %v33
  %v101 = vpop.f32.mrb[0].mxu0
  %v102 = vadd.f32 0.0, %v101
  %v103 = vpop.f32.mrb[0].mxu0
  %104 = vdwg.mxu0
  %v105 = vld [vmem:[%s3] sm:$0x1]
  %v106 = vmul.f32 %v102, 2.0
  %v108 = vlaneseq
  %v109 = vshrl.u32 %v108, 7
  %v110 = vsub.s32 0, %v109
  %v111 = vrot.slane %v105, %v110
  %v113 = vsub.f32 %v111, %v106
  %v114 = vld [vmem:[%s2] sm:$0xff]
  %116 = vset.pattern.permute.xlu0 0
  %117 = vperm.xlu0 %116, %v114
  %v118 = vpop.permute.xlu0 %117
  %v120 = vadd.f32 %v113, %v118
  %v121 = vmax.f32 %v120, 0.0
  %v122 = vld [vmem:[%s0] sm:$0xff]
  %v123 = vld [vmem:[%s1] sm:$0x1]
  %124 = vset.pattern.permute.xlu0 0
  %125 = vperm.xlu0 %124, %v122
  %v126 = vpop.permute.xlu0 %125
  %v127 = vlaneseq
  %v128 = vshrl.u32 %v127, 7
  %v129 = vsub.s32 0, %v128
  %v130 = vrot.slane %v123, %v129
  %vm131 = vcmp.eq.s32.totalorder %v126, %v130
  %v132 = vlaneseq
  %v133 = vshrl.u32 %v132, 7
  %v134 = vstv %s25
  %v135 = vadd.s32 %v133, %v134
  %v136 = vlaneseq
  %v137 = vand.u32 %v136, 127
  %vm138 = vcmp.ne.s32.totalorder %v135, %v137
  %vm139 = vmand %vm131, %vm138
  %v140 = vsel %vm139, %v121, 0.0
  %vm141 = vcmask 64512
  %v142 = vsel %vm141, %v140, -inf
  %143 = vmax.xlane.f32.xlu0 %v142
  %v144 = vpop.xlane.xlu0 %143
  %vm145 = vcmask 7168
  %146 = vst.msk [vmem:[%s6] sm:$0xff] %vm145, %v144
  %v147 = vsel %vm141, %v121, -inf
  %148 = vmax.xlane.f32.xlu0 %v147
  %v149 = vpop.xlane.xlu0 %148
  %v150 = vadd.f32 %v121, %v149
  %v151 = vsel %vm131, %v150, %v121
  %v152 = vsel %vm141, %v151, inf
  %153 = vmin.xlane.f32.xlu0 %v152
  %v154 = vpop.xlane.xlu0 %153
  %155 = vst.msk [vmem:[%s7] sm:$0xff] %vm145, %v154
  // Predicated region
  $region26: #{tpu_custom_call.1} parent=0 // pred_check
    _
  $region27: #{tpu_custom_call.1} parent=0 // pred_check_branch
    %157 = sbr.rel (0) target = $region29
  $region28: #{tpu_custom_call.1} parent=0 // pred_region
    _
  $region29: #{tpu_custom_call.1} parent=0 // pred_fallthru
    _
  // Predicated region
  $region30: #{tpu_custom_call.1} parent=0 // pred_check
    _
  $region31: #{tpu_custom_call.1} parent=0 // pred_check_branch
    %159 = sbr.rel (0) target = $region33
  $region32: #{tpu_custom_call.1} parent=0 // pred_region
    _
  $region33: #{tpu_custom_call.1} parent=0 // pred_fallthru
    _
  // Predicated region
  $region34: #{tpu_custom_call.1} parent=0 // pred_check
    _
  $region35: #{tpu_custom_call.1} parent=0 // pred_check_branch
    %161 = sbr.rel (0) target = $region37
  $region36: #{tpu_custom_call.1} parent=0 // pred_region
    _
  $region37: #{tpu_custom_call.1} parent=0 // pred_fallthru
    _
  // Predicated region
  $region38: #{tpu_custom_call.1} parent=0 // pred_check
    _
  $region39: #{tpu_custom_call.1} parent=0 // pred_check_branch
    %163 = sbr.rel (0) target = $region41
  $region40: #{tpu_custom_call.1} parent=0 // pred_region
    _
  $region41: #{tpu_custom_call.1} parent=0 // pred_fallthru
    _

</llo_original>
